<compile_context>
chip_gen: v6e
topology: v6e:2x2x1
jax: 0.10.0
libtpu: 0.0.40
codegen_flags: <defaults>
</compile_context>

<pallas_src>
import jax
import jax.numpy as jnp
import numpy as np
from jax.experimental import pallas as pl
from jax.experimental.pallas import tpu as pltpu


def _embed_a2a_kernel(x_ref, w_ref, b_ref, o_ref):
    # x_ref: (B, tm, Din) slab (source rank c, seq sub-chunk m of dest chunk d)
    # w_ref: (Din, tn), b_ref: (1, tn)
    # o_ref: (B, tm, tn) slab (dest rank d, hidden chunk c*Hn + n)
    B, tm, Din = x_ref.shape
    tn = w_ref.shape[1]
    # Fold batch into the matmul M dim; tm is a multiple of the sublane tile so this merge is
    # layout-trivial (no relayout copies).
    x = x_ref[...].reshape(B * tm, Din)
    y = jnp.dot(x, w_ref[...], preferred_element_type=jnp.float32)
    y = y + b_ref[...].astype(jnp.float32)          # f32 bias add (VPU-safe on v5e too)
    o_ref[...] = y.reshape(B, tm, tn).astype(o_ref.dtype)


def _vmem_capacity_bytes():
    """Physical per-core VMEM; 64 MiB on v7x, 128 MiB on v5e/v6e."""
    try:
        cap = int(pltpu.get_tpu_info().vmem_capacity_bytes)
        if cap > 0:
            return cap
    except Exception:
        pass
    try:
        kind = jax.devices()[0].device_kind.lower()
        if "v7" in kind:
            return 64 * 1024 * 1024
    except Exception:
        pass
    return 128 * 1024 * 1024


def _sublane_tile(dtype):
    return {4: 8, 2: 16, 1: 32}[jnp.dtype(dtype).itemsize]


def _divisors_desc(n, step):
    """Divisors of n that are multiples of `step`, descending (n must be a multiple of step)."""
    return [d for d in range(n, step - 1, -step) if n % d == 0]


def _choose_tiles(B, Sc, Din, H, x_bytes, w_bytes, b_bytes, o_bytes, budget_bytes, sublane):
    """Widest H tile (keeps weight traffic minimal), then widest seq tile, that fits VMEM."""
    def working_set(tm, tn):
        return (2 * B * tm * Din * x_bytes      # x slab (double-buffered by the pipeline)
                + 2 * B * tm * tn * o_bytes     # out slab
                + 2 * Din * tn * w_bytes        # weight (buffer count refined after order pick)
                + 2 * tn * b_bytes)             # bias
    h_tiles = _divisors_desc(H, 128)
    m_tiles = _divisors_desc(Sc, sublane)
    for tn in h_tiles:                          # prefer tn = H -> weight read exactly once
        for tm in m_tiles:                      # then the biggest seq slab that fits
            ws = working_set(tm, tn)
            if ws <= budget_bytes:
                return tn, tm, ws
    tn, tm = h_tiles[-1], m_tiles[-1]           # smallest legal tiles (tiny-VMEM fallback)
    return tn, tm, working_set(tm, tn)


def embedder_warpper_forward(x, w, b, world_size):
    """x: [W, B, S, Din] -> out: [W, B, S//W, H*W] (embed + all-to-all fused)."""
    W, B, S, Din = x.shape
    assert w.shape[0] == Din
    H = w.shape[1]
    assert W == world_size and S % world_size == 0
    Sc = S // world_size

    b = jnp.asarray(b)
    assert b.size == H, f"bias has {b.size} elements, expected {H}"
    b = b.reshape(1, H)

    out_dtype = x.dtype
    sub = _sublane_tile(out_dtype)
    # Lane-dense, unmasked stores: last block dim multiple of 128, seq block dim multiple of
    # the packed sublane tile (8 for f32, 16 for bf16).
    assert H % 128 == 0, f"H={H} must be a multiple of 128"
    assert Sc % sub == 0, f"S//world={Sc} must be a multiple of {sub} for dtype {out_dtype}"

    x_bytes = jnp.dtype(x.dtype).itemsize
    w_bytes = jnp.dtype(w.dtype).itemsize
    b_bytes = jnp.dtype(b.dtype).itemsize
    o_bytes = jnp.dtype(out_dtype).itemsize

    # ---- generation-aware VMEM budget ---------------------------------------------------
    cap = _vmem_capacity_bytes()                             # 64 MiB (v7x) or 128 MiB (v5e/v6e)
    limit_cap = min(cap - (8 << 20), int(cap * 0.85))        # ~54 MiB v7x, ~108 MiB v5e/v6e
    budget = limit_cap - (8 << 20)                           # headroom for Mosaic internal scratch

    tn, tm, working_set = _choose_tiles(B, Sc, Din, H, x_bytes, w_bytes, b_bytes, o_bytes,
                                        budget, sub)
    Hn, Mn = H // tn, Sc // tm

    # ---- grid-order selection: never redundantly stream the big operand ------------------
    # (c, d, m, n): x read once; full weight re-read (W*W*Mn - 1) extra times when Hn > 1.
    # (n, c, d, m): weight read once; full x re-read (Hn - 1) extra times.
    weight_extra = (W * W * Mn - 1) * Din * H * w_bytes if Hn > 1 else 0
    x_extra = (Hn - 1) * W * B * S * Din * x_bytes
    use_cdmn = (Hn == 1) or (weight_extra <= x_extra)

    # ---- weight / bias buffering ----------------------------------------------------------
    w_pipeline = None
    wbuf = 2
    if Hn == 1 and 2 * Din * H * w_bytes > (2 << 20):
        # Weight block index never changes -> double-buffering only wastes VMEM.
        w_pipeline = pl.Buffered(1)
        wbuf = 1
    elif use_cdmn and Hn > 1 and working_set + Din * tn * w_bytes <= budget:
        # Weight re-fetched every inner step: buffer one extra step ahead to hide the DMA.
        w_pipeline = pl.Buffered(3)
        wbuf = 3
    working_set += (wbuf - 2) * Din * tn * w_bytes

    if use_cdmn:
        grid = (W, W, Mn, Hn)                                # c, d, m, n  (n innermost)
        x_map = lambda c, d, m, n: (c, 0, d * Mn + m, 0)
        w_map = lambda c, d, m, n: (0, n)
        o_map = lambda c, d, m, n: (d, 0, m, c * Hn + n)     # <- the all-to-all permutation
    else:
        grid = (Hn, W, W, Mn)                                # n, c, d, m  (weight read once per n)
        x_map = lambda n, c, d, m: (c, 0, d * Mn + m, 0)
        w_map = lambda n, c, d, m: (0, n)
        o_map = lambda n, c, d, m: (d, 0, m, c * Hn + n)

    wspec_kwargs = {} if w_pipeline is None else {"pipeline_mode": w_pipeline}
    in_specs = [
        pl.BlockSpec((pl.Squeezed(), B, tm, Din), x_map),
        pl.BlockSpec((Din, tn), w_map, **wspec_kwargs),
        pl.BlockSpec((1, tn), w_map, **wspec_kwargs),
    ]
    out_spec = pl.BlockSpec((pl.Squeezed(), B, tm, tn), o_map)

    vmem_limit = int(min(max(working_set + (8 << 20), 32 << 20), limit_cap))

    flops = 2 * W * B * S * Din * H
    bytes_min = (W * B * S * Din * x_bytes + Din * H * w_bytes + H * b_bytes
                 + W * B * S * H * o_bytes)
    bytes_accessed = bytes_min + (weight_extra if use_cdmn else x_extra)

    return pl.pallas_call(
        _embed_a2a_kernel,
        out_shape=jax.ShapeDtypeStruct((W, B, Sc, H * world_size), out_dtype),
        grid_spec=pltpu.PrefetchScalarGridSpec(
            num_scalar_prefetch=0,
            grid=grid,
            in_specs=in_specs,
            out_specs=out_spec,
        ),
        compiler_params=pltpu.CompilerParams(
            # Every grid point writes a distinct output block (no accumulation), so all axes
            # are safe to megacore-shard on v7x; no-op on single-TC v5e/v6e.
            dimension_semantics=("parallel", "parallel", "parallel", "parallel"),
            vmem_limit_bytes=vmem_limit,
        ),
        cost_estimate=pl.CostEstimate(flops=flops, transcendentals=0,
                                      bytes_accessed=bytes_accessed),
    )(x, w, b)


def reference_forward(x, w, b, world_size):
    """Pure-JAX reference: embed, then emulate _all_to_all(scatter_dim=1, gather_dim=-1)."""
    b2 = jnp.asarray(b).reshape(1, -1)
    y = jnp.einsum("wbsd,dh->wbsh", x, w) + b2[None, None]  # [W, B, S, H]
    W, B, S, H = y.shape
    Sc = S // world_size
    outs = []
    for d in range(world_size):  # dest rank d
        chunks = [y[c, :, d * Sc:(d + 1) * Sc, :] for c in range(world_size)]
        outs.append(jnp.concatenate(chunks, axis=-1))       # [B, Sc, H*W]
    return jnp.stack(outs, axis=0)                           # [W, B, Sc, H*W]


if __name__ == "__main__":
    WORLD = 2      # emulated process-group size
    B = 2
    S = 16         # global per-rank sequence length (chunk Sc = 8)
    DIN = 32
    H = 128        # embedder output hidden size

    key = jax.random.PRNGKey(0)
    kx, kw, kb = jax.random.split(key, 3)
    # f32 here keeps the numeric check tight; for production use bf16 x/w (the kernel already
    # accumulates in f32 via preferred_element_type and adds the bias in f32), which halves
    # HBM traffic and engages the native bf16 MXU path — requires Sc % 16 == 0 for bf16.
    x = jax.random.normal(kx, (WORLD, B, S, DIN), dtype=jnp.float32)
    w = jax.random.normal(kw, (DIN, H), dtype=jnp.float32) * (1.0 / np.sqrt(DIN))
    b = jax.random.normal(kb, (H,), dtype=jnp.float32) * 0.02   # 1-D bias, handled by wrapper

    out = embedder_warpper_forward(x, w, b, WORLD)
    out = jax.block_until_ready(out)

    ref = jax.block_until_ready(reference_forward(x, w, b, WORLD))
    assert out.shape == (WORLD, B, S // WORLD, H * WORLD), out.shape
    np.testing.assert_allclose(np.asarray(out), np.asarray(ref), rtol=1e-5, atol=1e-5)

    print("KERNEL_OK")
</pallas_src>

<mosaic_0001>
module attributes {stable_mosaic.version = 11 : i64} {
  func.func @_embed_a2a_kernel(%arg0: i32, %arg1: i32, %arg2: i32, %arg3: i32, %arg4: memref<1x2x8x32xf32, #tpu.memory_space<vmem>>, %arg5: memref<32x128xf32, #tpu.memory_space<vmem>>, %arg6: memref<1x128xf32, #tpu.memory_space<vmem>>, %arg7: memref<1x2x8x128xf32, #tpu.memory_space<vmem>>) attributes {dimension_semantics = [#tpu.dimension_semantics<parallel>, #tpu.dimension_semantics<parallel>, #tpu.dimension_semantics<parallel>, #tpu.dimension_semantics<parallel>], iteration_bounds = array<i64: 2, 2, 1, 1>, scalar_prefetch = 0 : i64, scratch_operands = 0 : i64, tpu.core_type = #tpu.core_type<tc>, window_params = [{transform_indices = @transform_0, window_bounds = array<i64: 1, 2, 8, 32>}, {transform_indices = @transform_1, window_bounds = array<i64: 32, 128>}, {transform_indices = @transform_2, window_bounds = array<i64: 1, 128>}, {transform_indices = @transform_3, window_bounds = array<i64: 1, 2, 8, 128>}]} {
    %c0 = arith.constant 0 : index
    %c0_0 = arith.constant 0 : index
    %c0_1 = arith.constant 0 : index
    %c0_2 = arith.constant 0 : index
    %0 = vector.load %arg4[%c0, %c0_0, %c0_1, %c0_2] : memref<1x2x8x32xf32, #tpu.memory_space<vmem>>, vector<1x2x8x32xf32>
    %1 = vector.shape_cast %0 : vector<1x2x8x32xf32> to vector<2x8x32xf32>
    %2 = vector.shape_cast %1 : vector<2x8x32xf32> to vector<16x32xf32>
    %c0_3 = arith.constant 0 : index
    %c0_4 = arith.constant 0 : index
    %3 = vector.load %arg5[%c0_3, %c0_4] : memref<32x128xf32, #tpu.memory_space<vmem>>, vector<32x128xf32>
    %cst = arith.constant dense<0.000000e+00> : vector<16x128xf32>
    %4 = tpu.matmul %2, %3, %cst {dimension_numbers = #tpu.dot_dimension_numbers<[1], [0], [0], [1], [0, 0, 1, 1], [], []>} : vector<16x32xf32>, vector<32x128xf32>, vector<16x128xf32> -> vector<16x128xf32>
    %c0_5 = arith.constant 0 : index
    %c0_6 = arith.constant 0 : index
    %5 = vector.load %arg6[%c0_5, %c0_6] : memref<1x128xf32, #tpu.memory_space<vmem>>, vector<1x128xf32>
    %6 = vector.broadcast %5 : vector<1x128xf32> to vector<16x128xf32>
    %7 = arith.addf %4, %6 : vector<16x128xf32>
    %8 = vector.shape_cast %7 : vector<16x128xf32> to vector<2x8x128xf32>
    %c0_7 = arith.constant 0 : index
    %c0_8 = arith.constant 0 : index
    %c0_9 = arith.constant 0 : index
    %c0_10 = arith.constant 0 : index
    %9 = vector.load %arg7[%c0_7, %c0_8, %c0_9, %c0_10] : memref<1x2x8x128xf32, #tpu.memory_space<vmem>>, vector<1x2x8x128xf32>
    %10 = vector.shape_cast %9 : vector<1x2x8x128xf32> to vector<2x8x128xf32>
    %11 = vector.shape_cast %8 : vector<2x8x128xf32> to vector<1x2x8x128xf32>
    tpu.vector_store %arg7[%c0_7, %c0_8, %c0_9, %c0_10], %11 {strides = array<i32>} : memref<1x2x8x128xf32, #tpu.memory_space<vmem>>, vector<1x2x8x128xf32>,
    return
  }
  func.func @transform_0(%arg0: i32, %arg1: i32, %arg2: i32, %arg3: i32) -> (i32, i32, i32, i32) {
    %c1_i32 = arith.constant 1 : i32
    %0 = arith.muli %arg1, %c1_i32 : i32
    %1 = arith.addi %0, %arg2 : i32
    %c0_i32 = arith.constant 0 : i32
    %c0_i32_0 = arith.constant 0 : i32
    %c0_i32_1 = arith.constant 0 : i32
    return %arg0, %c0_i32, %1, %c0_i32_0 : i32, i32, i32, i32
  }
  func.func @transform_1(%arg0: i32, %arg1: i32, %arg2: i32, %arg3: i32) -> (i32, i32) {
    %c0_i32 = arith.constant 0 : i32
    %c0_i32_0 = arith.constant 0 : i32
    return %c0_i32, %arg3 : i32, i32
  }
  func.func @transform_2(%arg0: i32, %arg1: i32, %arg2: i32, %arg3: i32) -> (i32, i32) {
    %c0_i32 = arith.constant 0 : i32
    %c0_i32_0 = arith.constant 0 : i32
    return %c0_i32, %arg3 : i32, i32
  }
  func.func @transform_3(%arg0: i32, %arg1: i32, %arg2: i32, %arg3: i32) -> (i32, i32, i32, i32) {
    %c1_i32 = arith.constant 1 : i32
    %0 = arith.muli %arg0, %c1_i32 : i32
    %1 = arith.addi %0, %arg3 : i32
    %c0_i32 = arith.constant 0 : i32
    %c0_i32_0 = arith.constant 0 : i32
    return %arg1, %c0_i32, %arg2, %1 : i32, i32, i32, i32
  }
}

</mosaic_0001>

<llo_original>
// kernel: tpu_custom_call.1
$region0: #{tpu_custom_call.1}
  #allocation0 [shape = 'u32[]', space=smem, size = 0x4, offset = 0x4, fixed_abs, tag = 'smem constant byte address 0x4 - core index']
  #allocation1 [shape = 'u32[144,128]{1,0:T(1,128)}', space=vmem, size = 0x12000, scoped, tag = 'internal scratch']
  %s0 = inlined_call_operand.hbm [shape: f32[2,2,16,32], index: 0, kind: input, shape index: {}]
  %s1 = inlined_call_operand.hbm [shape: f32[32,128], index: 1, kind: input, shape index: {}]
  %s2 = inlined_call_operand.vmem [shape: f32[1,128], index: 2, kind: input, shape index: {}]
  %s3 = inlined_call_operand.hbm [shape: f32[2,2,8,256], index: 3, kind: output, shape index: {}]
  %s4 = sld [smem:[#allocation0]]
  $region53: #{tpu_custom_call.1} parent=0
    _
  %s6 = ssub.s32 1, %s4
  %s7 = scalar_select 0, %s6, %s4
  $region1: #{tpu_custom_call.1} parent=0
    #allocation2 [shape = 'u8[16384]{0}', space=vmem, size = 0x4000, scoped, tag = 'input window, operand 0']
    #allocation3 [shape = 's32[2]{0}', space=sflag, size = 0x8, scoped, tag = 'scoped memory for tpu_custom_call.1']
    #allocation4 [shape = 's32[2]{0}', space=sflag, size = 0x8, scoped, tag = 'scoped memory for tpu_custom_call.1']
    #allocation5 [shape = 'u8[16384]{0}', space=vmem, size = 0x4000, scoped, tag = 'input window, operand 1, single buffered']
    #allocation6 [shape = 's32[1]{0}', space=sflag, size = 0x4, scoped, tag = 'scoped memory for tpu_custom_call.1']
    #allocation7 [shape = 'u8[16384]{0}', space=vmem, size = 0x4000, scoped, tag = 'output window, operand 0']
    %8 = vsyncpa [#allocation3], 0
    %s9 = scalar_lea.sflag [#allocation3], 1
    %10 = vsyncpa %s9, 0
    %11 = vsyncpa [#allocation6], 0
    %12 = vsyncpa [#allocation4], 0
    %s13 = scalar_lea.sflag [#allocation4], 1
    %14 = vsyncpa %s13, 0
    loop: start=0, step=1, limit=6
    $region2: #{tpu_custom_call.1} parent=1 // loop_pre_header
      _
    $region3: #{tpu_custom_call.1} parent=1 // loop_header
      %s16 = sphi 0, %s20
      %p17 = scmp.ge.s32.totalorder %s16, 6
      %s23 = sphi 0, %s49
      %s24 = sphi 0, %s45
      %s25 = sphi 0, %s41
      %s26 = sphi 0, %s37
      %s27 = sphi 0, %s23
      %s28 = sphi 0, %s24
      %s29 = sphi 0, %s25
      %s30 = sphi 0, %s26
      %s31 = sphi 0, %s27
      %s32 = sphi 0, %s28
      %s33 = sphi 0, %s29
      %s34 = sphi 0, %s30
      %s56 = sphi 0, %s58
      %s59 = sphi 0, %s56
      %s60 = sphi 0, %s59
      %s76 = sphi 0, %s60
      %s82 = sphi 0, %s84
      %s85 = sphi 0, %s82
      %s86 = sphi 0, %s85
      %s102 = sphi 0, %s86
      %s108 = sphi 0, %s110
      %s111 = sphi 0, %s108
      %s112 = sphi 0, %s111
      %s128 = sphi 0, %s112
      %s140 = sphi 0, %s142
      %s143 = sphi 0, %s140
      %s144 = sphi 0, %s143
      %s160 = sphi 0, %s144
    $region4: #{tpu_custom_call.1} parent=1 // loop_header_branch
      %19 = sbr.rel (%p17) target = $region8
    $region5: #{tpu_custom_call.1} parent=1 // loop_body
      %s21 = ssub.s32 %s16, 1
      %s22 = ssub.s32 %s16, 2
      %s35 = sadd.s32 1, %s26
      %p36 = scmp.ge.s32.totalorder %s35, 1
      %s37 = scalar_select %p36, 0, %s35
      %s38 = sadd.s32 1, %s25
      %s39 = scalar_select %p36, %s38, %s25
      %p40 = scmp.ge.s32.totalorder %s39, 1
      %s41 = scalar_select %p40, 0, %s39
      %s42 = sadd.s32 1, %s24
      %s43 = scalar_select %p40, %s42, %s24
      %p44 = scmp.ge.s32.totalorder %s43, 2
      %s45 = scalar_select %p44, 0, %s43
      %s46 = sadd.s32 1, %s23
      %s47 = scalar_select %p44, %s46, %s23
      %p48 = scmp.ge.s32.totalorder %s47, 2
      %s49 = scalar_select %p48, 0, %s47
      %s50 = sadd.s32 %s24, %s25
      %s51 = sadd.s32 %s45, %s41
      %s52 = ssub.s32 %s23, %s49
      %s53 = ssub.s32 %s50, %s51
      %s54 = sor.u32 %s52, %s53
      %p55 = scmp.eq.s32.totalorder %s54, 0
      %s57 = sadd.s32 %s56, 1
      %s58 = scalar_select %p55, %s56, %s57
      %p61 = pneg %p55
      %p62 = scmp.eq.s32.totalorder %s16, 3
      %p63 = por %p61, %p62
      %p64 = scmp.ne.s32.totalorder %s56, %s59
      %p65 = scmp.eq.s32.totalorder %s16, 0
      %p66 = por %p64, %p65
      %p67 = scmp.ne.s32.totalorder %s56, %s59
      %p68 = scmp.eq.s32.totalorder %s21, 3
      %p69 = por %p67, %p68
      %p70 = scmp.ne.s32.totalorder %s59, %s60
      %p71 = scmp.eq.s32.totalorder %s21, 0
      %p72 = por %p70, %p71
      %p73 = scmp.ne.s32.totalorder %s59, %s60
      %p74 = scmp.eq.s32.totalorder %s22, 3
      %p75 = por %p73, %p74
      %p77 = scmp.ne.s32.totalorder %s60, %s76
      %p78 = scmp.eq.s32.totalorder %s22, 0
      %p79 = por %p77, %p78
      %s80 = ssub.s32 %s26, %s37
      %p81 = scmp.eq.s32.totalorder %s80, 0
      %s83 = sadd.s32 %s82, 1
      %s84 = scalar_select %p81, %s82, %s83
      %p87 = pneg %p81
      %p88 = scmp.eq.s32.totalorder %s16, 3
      %p89 = por %p87, %p88
      %p90 = scmp.ne.s32.totalorder %s82, %s85
      %p91 = scmp.eq.s32.totalorder %s16, 0
      %p92 = por %p90, %p91
      %p93 = scmp.ne.s32.totalorder %s82, %s85
      %p94 = scmp.eq.s32.totalorder %s21, 3
      %p95 = por %p93, %p94
      %p96 = scmp.ne.s32.totalorder %s85, %s86
      %p97 = scmp.eq.s32.totalorder %s21, 0
      %p98 = por %p96, %p97
      %p99 = scmp.ne.s32.totalorder %s85, %s86
      %p100 = scmp.eq.s32.totalorder %s22, 3
      %p101 = por %p99, %p100
      %p103 = scmp.ne.s32.totalorder %s86, %s102
      %p104 = scmp.eq.s32.totalorder %s22, 0
      %p105 = por %p103, %p104
      %s106 = ssub.s32 %s26, %s37
      %p107 = scmp.eq.s32.totalorder %s106, 0
      %s109 = sadd.s32 %s108, 1
      %s110 = scalar_select %p107, %s108, %s109
      %p113 = pneg %p107
      %p114 = scmp.eq.s32.totalorder %s16, 3
      %p115 = por %p113, %p114
      %p116 = scmp.ne.s32.totalorder %s108, %s111
      %p117 = scmp.eq.s32.totalorder %s16, 0
      %p118 = por %p116, %p117
      %p119 = scmp.ne.s32.totalorder %s108, %s111
      %p120 = scmp.eq.s32.totalorder %s21, 3
      %p121 = por %p119, %p120
      %p122 = scmp.ne.s32.totalorder %s111, %s112
      %p123 = scmp.eq.s32.totalorder %s21, 0
      %p124 = por %p122, %p123
      %p125 = scmp.ne.s32.totalorder %s111, %s112
      %p126 = scmp.eq.s32.totalorder %s22, 3
      %p127 = por %p125, %p126
      %p129 = scmp.ne.s32.totalorder %s112, %s128
      %p130 = scmp.eq.s32.totalorder %s22, 0
      %p131 = por %p129, %p130
      %s132 = sadd.s32 %s23, %s26
      %s133 = sadd.s32 %s49, %s37
      %s134 = ssub.s32 %s24, %s45
      %s135 = ssub.s32 %s25, %s41
      %s136 = sor.u32 %s134, %s135
      %s137 = ssub.s32 %s132, %s133
      %s138 = sor.u32 %s136, %s137
      %p139 = scmp.eq.s32.totalorder %s138, 0
      %s141 = sadd.s32 %s140, 1
      %s142 = scalar_select %p139, %s140, %s141
      %p145 = pneg %p139
      %p146 = scmp.eq.s32.totalorder %s16, 3
      %p147 = por %p145, %p146
      %p148 = scmp.ne.s32.totalorder %s140, %s143
      %p149 = scmp.eq.s32.totalorder %s16, 0
      %p150 = por %p148, %p149
      %p151 = scmp.ne.s32.totalorder %s140, %s143
      %p152 = scmp.eq.s32.totalorder %s21, 3
      %p153 = por %p151, %p152
      %p154 = scmp.ne.s32.totalorder %s143, %s144
      %p155 = scmp.eq.s32.totalorder %s21, 0
      %p156 = por %p154, %p155
      %p157 = scmp.ne.s32.totalorder %s143, %s144
      %p158 = scmp.eq.s32.totalorder %s22, 3
      %p159 = por %p157, %p158
      %p161 = scmp.ne.s32.totalorder %s144, %s160
      %p162 = scmp.eq.s32.totalorder %s22, 0
      %p163 = por %p161, %p162
      %p164 = scmp.le.s32.totalorder 1, %s16
      %p165 = scmp.lt.s32.totalorder %s16, 5
      %p166 = pnand %p164, %p165
      %p167 = pneg %p166
      // Predicated region
      $region9: #{tpu_custom_call.1} parent=5 // pred_check
        _
      $region10: #{tpu_custom_call.1} parent=5 // pred_check_branch
        %169 = sbr.rel (%p166) target = $region12
      $region11: #{tpu_custom_call.1} parent=5 // pred_region
        %s170 = ssub.s32 %s16, 1
        // Predicated region
        $region13: #{tpu_custom_call.1} parent=11 // pred_check
          %p171 = pneg %p98
        $region14: #{tpu_custom_call.1} parent=11 // pred_check_branch
          %173 = sbr.rel (%p171) target = $region16
        $region15: #{tpu_custom_call.1} parent=11 // pred_region
          %s175 = ssub.s32 512, 512
          %176 = vsyncadd [#allocation6], %s175
          %s177 = smul.addr %s30, 128
          %s178 = scalar_lea.hbm %s1, %s177
          %s179 = sshll.u32 [#allocation5], 4
          %s180 = int_to_ptr.vmem [resolvable:$true] %s179
          %185 = dma.hbm_to_vmem [thread:$0]  %s178, 512, %s180, [#allocation6], 128, 128, 8
        $region16: #{tpu_custom_call.1} parent=11 // pred_fallthru
          _
        // Predicated region
        $region17: #{tpu_custom_call.1} parent=11 // pred_check
          %p186 = pneg %p124
        $region18: #{tpu_custom_call.1} parent=11 // pred_check_branch
          %188 = sbr.rel (%p186) target = $region20
        $region19: #{tpu_custom_call.1} parent=11 // pred_region
          %p189 = scmp.lt.s32.totalorder %s30, 0
          %s190 = scalar_select %p189, %s30, 0
          %s191 = scalar_lea.vmem %s2, %s190
        $region20: #{tpu_custom_call.1} parent=11 // pred_fallthru
          _
      $region12: #{tpu_custom_call.1} parent=5 // pred_fallthru
        _
      %p192 = scmp.lt.s32.totalorder %s16, 4
      // Predicated region
      $region21: #{tpu_custom_call.1} parent=5 // pred_check
        %p193 = pneg %p192
      $region22: #{tpu_custom_call.1} parent=5 // pred_check_branch
        %195 = sbr.rel (%p193) target = $region24
      $region23: #{tpu_custom_call.1} parent=5 // pred_region
        // Predicated region
        $region25: #{tpu_custom_call.1} parent=23 // pred_check
          %p196 = pneg %p66
        $region26: #{tpu_custom_call.1} parent=23 // pred_check_branch
          %198 = sbr.rel (%p196) target = $region28
        $region27: #{tpu_custom_call.1} parent=23 // pred_region
          %s199 = sand.u32 %s56, 1
          %s200 = scalar_lea.sflag [#allocation3], %s199
          %s201 = sand.u32 %s56, 1
          %s202 = smul.addr %s201, 16
          %s203 = scalar_lea.vmem [#allocation2], %s202
          %s204 = sadd.s32 %s24, %s25
          %s206 = ssub.s32 256, 256
          %207 = vsyncadd %s200, %s206
          %s208 = smul.addr %s23, 4
          %s209 = sadd.s32 %s204, %s208
          %s210 = smul.addr %s209, 128
          %s211 = scalar_lea.hbm %s0, %s210
          %s212 = sshll.u32 %s203, 4
          %s213 = int_to_ptr.vmem [resolvable:$true] %s212
          %218 = dma.hbm_to_vmem [thread:$0]  %s211, 256, %s213, %s200, 256, 128, 8
        $region28: #{tpu_custom_call.1} parent=23 // pred_fallthru
          _
      $region24: #{tpu_custom_call.1} parent=5 // pred_fallthru
        _
      %p219 = scmp.le.s32.totalorder 1, %s16
      %p220 = scmp.lt.s32.totalorder %s16, 5
      %p221 = pnand %p219, %p220
      %p222 = pneg %p221
      // Predicated region
      $region29: #{tpu_custom_call.1} parent=5 // pred_check
        _
      $region30: #{tpu_custom_call.1} parent=5 // pred_check_branch
        %224 = sbr.rel (%p221) target = $region32
      $region31: #{tpu_custom_call.1} parent=5 // pred_region
        %s225 = ssub.s32 %s16, 1
        %s226 = sand.u32 %s59, 1
        %s227 = scalar_lea.sflag [#allocation3], %s226
        %s228 = sand.u32 %s59, 1
        %s229 = smul.addr %s228, 16
        %s230 = scalar_lea.vmem [#allocation2], %s229
        // Predicated region
        $region33: #{tpu_custom_call.1} parent=31 // pred_check
          %p231 = pneg %p72
        $region34: #{tpu_custom_call.1} parent=31 // pred_check_branch
          %233 = sbr.rel (%p231) target = $region36
        $region35: #{tpu_custom_call.1} parent=31 // pred_region
          %234 = dma.done %s227, 256
        $region36: #{tpu_custom_call.1} parent=31 // pred_fallthru
          _
        // Predicated region
        $region37: #{tpu_custom_call.1} parent=31 // pred_check
          %p235 = pneg %p98
        $region38: #{tpu_custom_call.1} parent=31 // pred_check_branch
          %237 = sbr.rel (%p235) target = $region40
        $region39: #{tpu_custom_call.1} parent=31 // pred_region
          %238 = dma.done [#allocation6], 512
        $region40: #{tpu_custom_call.1} parent=31 // pred_fallthru
          _
        %s239 = sand.u32 %s59, 1
        %s240 = scalar_lea.sflag [#allocation3], %s239
        %s241 = sand.u32 %s59, 1
        %s242 = smul.addr %s241, 16
        %s243 = scalar_lea.vmem [#allocation2], %s242
        %p244 = pneg %p72
        %p245 = pneg %p69
        %p246 = pneg %p98
        %p247 = pneg %p95
        %p248 = scmp.lt.s32.totalorder %s30, 0
        %s249 = scalar_select %p248, %s30, 0
        %s250 = scalar_lea.vmem %s2, %s249
        %p251 = pneg %p124
        %p252 = pneg %p121
        %p253 = pneg %p156
        %p254 = pneg %p153
        %s255 = sand.u32 %s143, 1
        %s256 = scalar_lea.sflag [#allocation4], %s255
        %s257 = sand.u32 %s143, 1
        %s258 = smul.addr %s257, 16
        %s259 = scalar_lea.vmem [#allocation7], %s258
        %s260 = sadd.s32 %s28, %s29
        %p261 = scmp.lt.s32.totalorder %s30, 0
        %s262 = scalar_select %p261, %s30, 0
        %s263 = scalar_lea.vmem %s2, %s262
        %s264 = sadd.s32 %s27, %s30
        %v265 = vld [vmem:[%s230] sm:$0xff]
        %v266 = vld [vmem:[%s230 + $0x8] sm:$0xff]
        %v267 = vld [vmem:[#allocation5] sm:$0xff]
        %v268 = vld [vmem:[#allocation5 + $0x8] sm:$0xff]
        %v269 = vld [vmem:[#allocation5 + $0x10] sm:$0xff]
        %v270 = vld [vmem:[#allocation5 + $0x18] sm:$0xff]
        %v271 = vld [vmem:[%s263] sm:$0x1]
        %v273 = vlaneseq
        %v274 = vshrl.u32 %v273, 7
        %v275 = vsub.s32 0, %v274
        %v276 = vrot.slane %v271, %v275
        %vm278 = vcmask 261120
        %v280 = vsel %vm278, %v265, 0
        %v283 = vsel %vm278, %v266, 0
        %285 = vmatprep.subr.mxu0 0.0
        %286 = vmatpush1.msra.mxu0 0.0
        %287 = vmatprep.subr.mxu0 0.0
        %288 = vmatpush1.msra.mxu0 0.0
        %289 = vmatprep.subr.mxu0 0.0
        %290 = vmatpush1.msra.mxu0 0.0
        %291 = vmatprep.subr.mxu0 0.0
        %292 = vmatpush1.msra.mxu0 0.0
        %293 = vmatprep.subr.mxu0 0.0
        %294 = vmatpush1.msra.mxu0 0.0
        %295 = vmatprep.subr.mxu0 0.0
        %296 = vmatpush1.msra.mxu0 0.0
        %297 = vmatprep.subr.mxu0 0.0
        %298 = vmatpush1.msra.mxu0 0.0
        %299 = vmatprep.subr.mxu0 0.0
        %300 = vmatpush1.msra.mxu0 0.0
        %301 = vmatprep.subr.mxu0 0.0
        %302 = vmatpush1.msra.mxu0 0.0
        %303 = vmatprep.subr.mxu0 0.0
        %304 = vmatpush1.msra.mxu0 0.0
        %305 = vmatprep.subr.mxu0 0.0
        %306 = vmatpush1.msra.mxu0 0.0
        %307 = vmatprep.subr.mxu0 0.0
        %308 = vmatpush1.msra.mxu0 0.0
        %309 = vmatprep.subr.mxu0 0.0
        %310 = vmatpush1.msra.mxu0 %v270
        %311 = vmatprep.subr.mxu0 0.0
        %312 = vmatpush1.msra.mxu0 %v269
        %313 = vmatprep.subr.mxu0 0.0
        %314 = vmatpush1.msra.mxu0 %v268
        %315 = vmatprep.subr.mxu0 0.0
        %316 = vmatpush1.msra.mxu0 %v267
        %317 = vmatprep.subr.mxu0 0.0
        %318 = vmatpush2.msra.mxu0 0.0
        %319 = vmatprep.subr.mxu0 0.0
        %320 = vmatpush2.msra.mxu0 0.0
        %321 = vmatprep.subr.mxu0 0.0
        %322 = vmatpush2.msra.mxu0 0.0
        %323 = vmatprep.subr.mxu0 0.0
        %324 = vmatpush2.msra.mxu0 0.0
        %325 = vmatprep.subr.mxu0 0.0
        %326 = vmatpush2.msra.mxu0 0.0
        %327 = vmatprep.subr.mxu0 0.0
        %328 = vmatpush2.msra.mxu0 0.0
        %329 = vmatprep.subr.mxu0 0.0
        %330 = vmatpush2.msra.mxu0 0.0
        %331 = vmatprep.subr.mxu0 0.0
        %332 = vmatpush2.msra.mxu0 0.0
        %333 = vmatprep.subr.mxu0 0.0
        %334 = vmatpush2.msra.mxu0 0.0
        %335 = vmatprep.subr.mxu0 0.0
        %336 = vmatpush2.msra.mxu0 0.0
        %337 = vmatprep.subr.mxu0 0.0
        %338 = vmatpush2.msra.mxu0 0.0
        %339 = vmatprep.subr.mxu0 0.0
        %340 = vmatpush2.msra.mxu0 0.0
        %341 = vmatprep.subr.mxu0 0.0
        %342 = vmatpush2.msra.mxu0 0.0
        %343 = vmatprep.subr.mxu0 0.0
        %344 = vmatpush2.msra.mxu0 0.0
        %345 = vmatprep.subr.mxu0 0.0
        %346 = vmatpush2.msra.mxu0 0.0
        %347 = vmatprep.subr.mxu0 0.0
        %348 = vmatpush2.msra.mxu0 0.0
        %349 = vmatprep.mubr.f32.mxu0 0.0
        %350 = vmatmul.mubr.f32.gmra.mxu0 %v280
        %v351 = vpop.f32.mrf.mxu0
        %v352 = vadd.f32 %v276, %v351
        %v353 = vpop.f32.mrf.mxu0
        %354 = vmatprep.mubr.f32.mxu0 0.0
        %355 = vmatmul.mubr.f32.gmra.mxu0 %v283
        %v356 = vpop.f32.mrf.mxu0
        %v357 = vadd.f32 %v276, %v356
        %v358 = vpop.f32.mrf.mxu0
        %359 = vdwg.mxu0
        %360 = vst [vmem:[%s259] sm:$0xff] %v352
        %361 = vst [vmem:[%s259 + $0x8] sm:$0xff] %v357
        %s362 = sand.u32 %s143, 1
        %s363 = scalar_lea.sflag [#allocation4], %s362
        %s364 = sand.u32 %s143, 1
        %s365 = smul.addr %s364, 16
        %s366 = scalar_lea.vmem [#allocation7], %s365
        // Predicated region
        $region41: #{tpu_custom_call.1} parent=31 // pred_check
          %p367 = pneg %p153
        $region42: #{tpu_custom_call.1} parent=31 // pred_check_branch
          %369 = sbr.rel (%p367) target = $region44
        $region43: #{tpu_custom_call.1} parent=31 // pred_region
          %s370 = sadd.s32 %s27, %s30
          %s372 = ssub.s32 256, 256
          %373 = vsyncadd %s363, %s372
          %s374 = smul.addr %s29, 2
          %s375 = sadd.s32 %s370, %s374
          %s376 = smul.addr %s28, 4
          %s377 = sadd.s32 %s375, %s376
          %s378 = smul.addr %s377, 128
          %s379 = scalar_lea.hbm %s3, %s378
          %s380 = sshll.u32 %s366, 4
          %s381 = int_to_ptr.vmem [resolvable:$true] %s380
          %386 = dma.vmem_to_hbm [thread:$0]  %s381, 256, %s379, %s363, 128, 256, 8
        $region44: #{tpu_custom_call.1} parent=31 // pred_fallthru
          _
      $region32: #{tpu_custom_call.1} parent=5 // pred_fallthru
        _
      %p387 = scmp.le.s32.totalorder 2, %s16
      // Predicated region
      $region45: #{tpu_custom_call.1} parent=5 // pred_check
        %p388 = pneg %p387
      $region46: #{tpu_custom_call.1} parent=5 // pred_check_branch
        %390 = sbr.rel (%p388) target = $region48
      $region47: #{tpu_custom_call.1} parent=5 // pred_region
        %s391 = ssub.s32 %s16, 2
        // Predicated region
        $region49: #{tpu_custom_call.1} parent=47 // pred_check
          %p392 = pneg %p159
        $region50: #{tpu_custom_call.1} parent=47 // pred_check_branch
          %394 = sbr.rel (%p392) target = $region52
        $region51: #{tpu_custom_call.1} parent=47 // pred_region
          %s395 = sand.u32 %s144, 1
          %s396 = scalar_lea.sflag [#allocation4], %s395
          %s397 = sand.u32 %s144, 1
          %s398 = smul.addr %s397, 16
          %s399 = scalar_lea.vmem [#allocation7], %s398
          %400 = dma.done %s396, 256
        $region52: #{tpu_custom_call.1} parent=47 // pred_fallthru
          _
      $region48: #{tpu_custom_call.1} parent=5 // pred_fallthru
        _
    $region6: #{tpu_custom_call.1} parent=1 // loop_footer
      %s20 = sadd.s32 1, %s16
    $region7: #{tpu_custom_call.1} parent=1 // loop_footer_branch
      %15 = sbr.rel target = $region3
    $region8: #{tpu_custom_call.1} parent=1 // loop_exit
      _
    %401 = vsyncpa [#allocation3], 1
    %s402 = scalar_lea.sflag [#allocation3], 1
    %403 = vsyncpa %s402, 1
    %404 = vsyncpa [#allocation6], 1
    %405 = vsyncpa [#allocation4], 1
    %s406 = scalar_lea.sflag [#allocation4], 1
    %407 = vsyncpa %s406, 1

</llo_original>
